<compile_context>
chip_gen: v6e
topology: v6e:2x2x1
jax: 0.10.0
libtpu: 0.0.40
codegen_flags: <defaults>
</compile_context>

<pallas_src>
from functools import partial

import jax
import jax.numpy as jnp
from jax.experimental import pallas as pl
from jax.experimental.pallas import tpu as pltpu


def _round_up(x, m):
    return (x + m - 1) // m * m


def _padded_plane_bytes(h, w, dtype):
    """VMEM footprint of one (h, w) plane after (sublane, 128) tiling."""
    itemsize = jnp.dtype(dtype).itemsize
    sublane = 32 // itemsize          # 8 for f32, 16 for bf16, 32 for int8
    return _round_up(h, sublane) * _round_up(w, 128) * itemsize


def _crop_kernel(x_ref, o_ref, *, r, c, h_out, w_out):
    # Pure data movement: the input block holds full (h, w) planes; slice the
    # cropped window (static offsets) and store into the output block.
    o_ref[...] = x_ref[:, r:r + h_out, c:c + w_out]


def crop_layer(x, crop_set=(-1, -1)):
    """Pallas implementation of CropLayer.forward for NCHW input `x`."""
    rows_to_crop = -crop_set[0]
    cols_to_crop = -crop_set[1]
    # Reference slicing semantics require strictly positive crop amounts
    # (r == 0 would make the PyTorch slice `0:-0` -> empty tensor).
    assert rows_to_crop > 0 and cols_to_crop > 0
    n, ch, h, w = x.shape
    h_out = h - 2 * rows_to_crop
    w_out = w - 2 * cols_to_crop
    assert h_out > 0 and w_out > 0

    nc = n * ch
    x_flat = x.reshape(nc, h, w)      # free for contiguous NCHW

    itemsize = jnp.dtype(x.dtype).itemsize
    per_plane = (_padded_plane_bytes(h, w, x.dtype)
                 + _padded_plane_bytes(h_out, w_out, x.dtype))

    # <= 6 MiB (padded, in+out) per block => <= 12 MiB live with the default
    # double buffering: fits v5e's 16 MiB default scoped VMEM and leaves
    # plenty of headroom on v7x's 64 MiB physical VMEM.
    budget = 6 << 20
    planes_per_block = max(1, min(nc, budget // per_plane))
    # Keep >= 4 grid steps when possible (megacore split + DMA overlap); the
    # ~0.35 us per-step overhead is noise at these block sizes.
    if nc >= 4:
        planes_per_block = min(planes_per_block, pl.cdiv(nc, 4))
    grid_steps = pl.cdiv(nc, planes_per_block)

    vmem_needed = 2 * planes_per_block * per_plane + (2 << 20)
    vmem_limit = int(min(max(vmem_needed, 16 << 20), 60 << 20))

    kernel = partial(_crop_kernel, r=rows_to_crop, c=cols_to_crop,
                     h_out=h_out, w_out=w_out)

    out_flat = pl.pallas_call(
        kernel,
        out_shape=jax.ShapeDtypeStruct((nc, h_out, w_out), x.dtype),
        grid=(grid_steps,),
        in_specs=[pl.BlockSpec((planes_per_block, h, w),
                               lambda i: (i, 0, 0))],
        out_specs=pl.BlockSpec((planes_per_block, h_out, w_out),
                               lambda i: (i, 0, 0)),
        compiler_params=pltpu.CompilerParams(
            dimension_semantics=("parallel",),
            vmem_limit_bytes=vmem_limit),
        cost_estimate=pl.CostEstimate(
            flops=0,
            transcendentals=0,
            bytes_accessed=(nc * h * w + nc * h_out * w_out) * itemsize),
    )(x_flat)

    return out_flat.reshape(n, ch, h_out, w_out)


if __name__ == "__main__":
    key = jax.random.PRNGKey(0)
    # Small NCHW input consistent with the module's conv-style usage.
    x = jax.random.normal(key, (2, 4, 16, 16), dtype=jnp.float32)

    # crop_set = (-1, -1)  ->  rows_to_crop = 1, cols_to_crop = 1
    out = jax.block_until_ready(crop_layer(x, (-1, -1)))
    ref = x[:, :, 1:-1, 1:-1]
    assert out.shape == ref.shape == (2, 4, 14, 14)
    assert jnp.array_equal(out, ref)

    # Different crop amount (exercises the static slice offsets).
    out2 = jax.block_until_ready(crop_layer(x, (-2, -2)))
    assert out2.shape == (2, 4, 12, 12)
    assert jnp.array_equal(out2, x[:, :, 2:-2, 2:-2])

    # Ragged grid: n*C = 5 is not divisible by the chosen planes-per-block,
    # exercising the masked last block.
    x3 = jax.random.normal(jax.random.PRNGKey(0), (1, 5, 16, 16),
                           dtype=jnp.float32)
    out3 = jax.block_until_ready(crop_layer(x3, (-1, -1)))
    assert out3.shape == (1, 5, 14, 14)
    assert jnp.array_equal(out3, x3[:, :, 1:-1, 1:-1])

    print("KERNEL_OK")
</pallas_src>

<mosaic_0001>
module attributes {stable_mosaic.version = 11 : i64} {
  func.func @_crop_kernel(%arg0: i32, %arg1: memref<2x16x16xf32, #tpu.memory_space<vmem>>, %arg2: memref<2x14x14xf32, #tpu.memory_space<vmem>>) attributes {dimension_semantics = [#tpu.dimension_semantics<parallel>], iteration_bounds = array<i64: 4>, scalar_prefetch = 0 : i64, scratch_operands = 0 : i64, tpu.core_type = #tpu.core_type<tc>, window_params = [{transform_indices = @transform_0, window_bounds = array<i64: 2, 16, 16>}, {transform_indices = @transform_1, window_bounds = array<i64: 2, 14, 14>}]} {
    %c0 = arith.constant 0 : index
    %c1 = arith.constant 1 : index
    %c1_0 = arith.constant 1 : index
    %0 = vector.load %arg1[%c0, %c1, %c1_0] : memref<2x16x16xf32, #tpu.memory_space<vmem>>, vector<2x14x14xf32>
    %c0_1 = arith.constant 0 : index
    %c0_2 = arith.constant 0 : index
    %c0_3 = arith.constant 0 : index
    %1 = vector.load %arg2[%c0_1, %c0_2, %c0_3] : memref<2x14x14xf32, #tpu.memory_space<vmem>>, vector<2x14x14xf32>
    tpu.vector_store %arg2[%c0_1, %c0_2, %c0_3], %0 {strides = array<i32>} : memref<2x14x14xf32, #tpu.memory_space<vmem>>, vector<2x14x14xf32>,
    return
  }
  func.func @transform_0(%arg0: i32) -> (i32, i32, i32) {
    %c0_i32 = arith.constant 0 : i32
    %c0_i32_0 = arith.constant 0 : i32
    %c0_i32_1 = arith.constant 0 : i32
    return %arg0, %c0_i32, %c0_i32_0 : i32, i32, i32
  }
  func.func @transform_1(%arg0: i32) -> (i32, i32, i32) {
    %c0_i32 = arith.constant 0 : i32
    %c0_i32_0 = arith.constant 0 : i32
    %c0_i32_1 = arith.constant 0 : i32
    return %arg0, %c0_i32, %c0_i32_0 : i32, i32, i32
  }
}

</mosaic_0001>

<llo_original>
// kernel: tpu_custom_call.1
$region0: #{tpu_custom_call.1}
  #allocation0 [shape = 'u32[]', space=smem, size = 0x4, offset = 0x4, fixed_abs, tag = 'smem constant byte address 0x4 - core index']
  #allocation1 [shape = 'u32[144,128]{1,0:T(1,128)}', space=vmem, size = 0x12000, scoped, tag = 'internal scratch']
  %s0 = inlined_call_operand.hbm [shape: f32[8,16,16], index: 0, kind: input, shape index: {}]
  %s1 = inlined_call_operand.vmem [shape: f32[8,14,14], index: 1, kind: output, shape index: {}]
  %s2 = sld [smem:[#allocation0]]
  $region41: #{tpu_custom_call.1} parent=0
    _
  %s4 = ssub.s32 1, %s2
  %s5 = scalar_select 0, %s4, %s2
  $region1: #{tpu_custom_call.1} parent=0
    #allocation2 [shape = 'u8[32768]{0}', space=vmem, size = 0x8000, scoped, tag = 'input window, operand 0']
    #allocation3 [shape = 's32[2]{0}', space=sflag, size = 0x8, scoped, tag = 'scoped memory for tpu_custom_call.1']
    %6 = vsyncpa [#allocation3], 0
    %s7 = scalar_lea.sflag [#allocation3], 1
    %8 = vsyncpa %s7, 0
    loop: start=0, step=1, limit=6
    $region2: #{tpu_custom_call.1} parent=1 // loop_pre_header
      _
    $region3: #{tpu_custom_call.1} parent=1 // loop_header
      %s10 = sphi 0, %s14
      %p11 = scmp.ge.s32.totalorder %s10, 6
      %s20 = sphi 0, %s22
      %s23 = sphi 0, %s20
      %s24 = sphi 0, %s23
      %s40 = sphi 0, %s24
      %s46 = sphi 0, %s48
      %s49 = sphi 0, %s46
      %s50 = sphi 0, %s49
      %s66 = sphi 0, %s50
    $region4: #{tpu_custom_call.1} parent=1 // loop_header_branch
      %13 = sbr.rel (%p11) target = $region8
    $region5: #{tpu_custom_call.1} parent=1 // loop_body
      %s15 = ssub.s32 %s10, 1
      %s16 = ssub.s32 %s10, 2
      %s17 = sadd.s32 %s10, 1
      %s18 = ssub.s32 %s10, %s17
      %p19 = scmp.eq.s32.totalorder %s18, 0
      %s21 = sadd.s32 %s20, 1
      %s22 = scalar_select %p19, %s20, %s21
      %p25 = pneg %p19
      %p26 = scmp.eq.s32.totalorder %s10, 3
      %p27 = por %p25, %p26
      %p28 = scmp.ne.s32.totalorder %s20, %s23
      %p29 = scmp.eq.s32.totalorder %s10, 0
      %p30 = por %p28, %p29
      %p31 = scmp.ne.s32.totalorder %s20, %s23
      %p32 = scmp.eq.s32.totalorder %s15, 3
      %p33 = por %p31, %p32
      %p34 = scmp.ne.s32.totalorder %s23, %s24
      %p35 = scmp.eq.s32.totalorder %s15, 0
      %p36 = por %p34, %p35
      %p37 = scmp.ne.s32.totalorder %s23, %s24
      %p38 = scmp.eq.s32.totalorder %s16, 3
      %p39 = por %p37, %p38
      %p41 = scmp.ne.s32.totalorder %s24, %s40
      %p42 = scmp.eq.s32.totalorder %s16, 0
      %p43 = por %p41, %p42
      %s44 = ssub.s32 %s10, %s17
      %p45 = scmp.eq.s32.totalorder %s44, 0
      %s47 = sadd.s32 %s46, 1
      %s48 = scalar_select %p45, %s46, %s47
      %p51 = pneg %p45
      %p52 = scmp.eq.s32.totalorder %s10, 3
      %p53 = por %p51, %p52
      %p54 = scmp.ne.s32.totalorder %s46, %s49
      %p55 = scmp.eq.s32.totalorder %s10, 0
      %p56 = por %p54, %p55
      %p57 = scmp.ne.s32.totalorder %s46, %s49
      %p58 = scmp.eq.s32.totalorder %s15, 3
      %p59 = por %p57, %p58
      %p60 = scmp.ne.s32.totalorder %s49, %s50
      %p61 = scmp.eq.s32.totalorder %s15, 0
      %p62 = por %p60, %p61
      %p63 = scmp.ne.s32.totalorder %s49, %s50
      %p64 = scmp.eq.s32.totalorder %s16, 3
      %p65 = por %p63, %p64
      %p67 = scmp.ne.s32.totalorder %s50, %s66
      %p68 = scmp.eq.s32.totalorder %s16, 0
      %p69 = por %p67, %p68
      %p70 = scmp.le.s32.totalorder 1, %s10
      %p71 = scmp.lt.s32.totalorder %s10, 5
      %p72 = pnand %p70, %p71
      %p73 = pneg %p72
      // Predicated region
      $region9: #{tpu_custom_call.1} parent=5 // pred_check
        _
      $region10: #{tpu_custom_call.1} parent=5 // pred_check_branch
        %75 = sbr.rel (%p72) target = $region12
      $region11: #{tpu_custom_call.1} parent=5 // pred_region
        %s76 = ssub.s32 %s10, 1
      $region12: #{tpu_custom_call.1} parent=5 // pred_fallthru
        _
      %p77 = scmp.lt.s32.totalorder %s10, 4
      // Predicated region
      $region13: #{tpu_custom_call.1} parent=5 // pred_check
        %p78 = pneg %p77
      $region14: #{tpu_custom_call.1} parent=5 // pred_check_branch
        %80 = sbr.rel (%p78) target = $region16
      $region15: #{tpu_custom_call.1} parent=5 // pred_region
        // Predicated region
        $region17: #{tpu_custom_call.1} parent=15 // pred_check
          %p81 = pneg %p30
        $region18: #{tpu_custom_call.1} parent=15 // pred_check_branch
          %83 = sbr.rel (%p81) target = $region20
        $region19: #{tpu_custom_call.1} parent=15 // pred_region
          %s84 = sand.u32 %s20, 1
          %s85 = scalar_lea.sflag [#allocation3], %s84
          %s86 = sand.u32 %s20, 1
          %s87 = smul.addr %s86, 32
          %s88 = scalar_lea.vmem [#allocation2], %s87
          %s89 = smul.u32 2, %s10
          %s91 = ssub.s32 512, 512
          %92 = vsyncadd %s85, %s91
          %s93 = smul.addr %s89, 2
          %s94 = smul.addr %s93, 128
          %s95 = scalar_lea.hbm %s0, %s94
          %s96 = sshll.u32 %s88, 4
          %s97 = int_to_ptr.vmem [resolvable:$true] %s96
          %102 = dma.hbm_to_vmem [thread:$0]  %s95, 512, %s97, %s85, 128, 128, 8
        $region20: #{tpu_custom_call.1} parent=15 // pred_fallthru
          _
      $region16: #{tpu_custom_call.1} parent=5 // pred_fallthru
        _
      %p103 = scmp.le.s32.totalorder 1, %s10
      %p104 = scmp.lt.s32.totalorder %s10, 5
      %p105 = pnand %p103, %p104
      %p106 = pneg %p105
      // Predicated region
      $region21: #{tpu_custom_call.1} parent=5 // pred_check
        _
      $region22: #{tpu_custom_call.1} parent=5 // pred_check_branch
        %108 = sbr.rel (%p105) target = $region24
      $region23: #{tpu_custom_call.1} parent=5 // pred_region
        %s109 = ssub.s32 %s10, 1
        %s110 = sand.u32 %s23, 1
        %s111 = scalar_lea.sflag [#allocation3], %s110
        %s112 = sand.u32 %s23, 1
        %s113 = smul.addr %s112, 32
        %s114 = scalar_lea.vmem [#allocation2], %s113
        // Predicated region
        $region25: #{tpu_custom_call.1} parent=23 // pred_check
          %p115 = pneg %p36
        $region26: #{tpu_custom_call.1} parent=23 // pred_check_branch
          %117 = sbr.rel (%p115) target = $region28
        $region27: #{tpu_custom_call.1} parent=23 // pred_region
          %118 = dma.done %s111, 512
        $region28: #{tpu_custom_call.1} parent=23 // pred_fallthru
          _
        %s119 = sand.u32 %s23, 1
        %s120 = scalar_lea.sflag [#allocation3], %s119
        %s121 = sand.u32 %s23, 1
        %s122 = smul.addr %s121, 32
        %s123 = scalar_lea.vmem [#allocation2], %s122
        %p124 = pneg %p36
        %p125 = pneg %p33
        %p126 = pneg %p62
        %p127 = pneg %p59
        %s128 = smul.u32 2, %s15
        %p129 = scmp.lt.s32.totalorder %s128, 7
        %s130 = scalar_select %p129, %s128, 7
        %s131 = smul.addr %s130, 2
        %s132 = smul.addr %s131, 8
        %s133 = scalar_lea.vmem %s1, %s132
        %s134 = smul.u32 2, %s15
        %s135 = smul.u32 2, %s15
        %p136 = scmp.lt.s32.totalorder %s135, 7
        %s137 = scalar_select %p136, %s135, 7
        %s138 = smul.addr %s137, 2
        %s139 = smul.addr %s138, 8
        %s140 = scalar_lea.vmem %s1, %s139
        %s141 = smul.u32 2, %s15
        %v142 = vld [vmem:[%s114 + $0x1] sm:$0xff]
        %v143 = vld [vmem:[%s114 + $0x9] sm:$0x3f]
        %v144 = vld [vmem:[%s114 + $0x11] sm:$0xff]
        %v145 = vld [vmem:[%s114 + $0x19] sm:$0x3f]
        %150 = vrot.lane.b32.xlu0 %v142, 127
        %v151 = vpop.permute.xlu0 %150
        %152 = vrot.lane.b32.xlu0 %v143, 127
        %v153 = vpop.permute.xlu0 %152
        %154 = vrot.lane.b32.xlu0 %v144, 127
        %v155 = vpop.permute.xlu0 %154
        %156 = vrot.lane.b32.xlu0 %v145, 127
        %v157 = vpop.permute.xlu0 %156
        %vm162 = vcmask 113664
        %163 = vst.msk [vmem:[%s140] sm:$0xff] %vm162, %v151
        %vm164 = vcmask 111616
        %165 = vst.msk [vmem:[%s140 + $0x8] sm:$0x3f] %vm164, %v153
        %166 = vst.msk [vmem:[%s140 + $0x10] sm:$0xff] %vm162, %v155
        %167 = vst.msk [vmem:[%s140 + $0x18] sm:$0x3f] %vm164, %v157
        %s168 = smul.u32 2, %s15
        %p169 = scmp.lt.s32.totalorder %s168, 7
        %s170 = scalar_select %p169, %s168, 7
        %s171 = smul.addr %s170, 2
        %s172 = smul.addr %s171, 8
        %s173 = scalar_lea.vmem %s1, %s172
        // Predicated region
        $region29: #{tpu_custom_call.1} parent=23 // pred_check
          %p174 = pneg %p59
        $region30: #{tpu_custom_call.1} parent=23 // pred_check_branch
          %176 = sbr.rel (%p174) target = $region32
        $region31: #{tpu_custom_call.1} parent=23 // pred_region
          %s177 = smul.u32 2, %s15
        $region32: #{tpu_custom_call.1} parent=23 // pred_fallthru
          _
      $region24: #{tpu_custom_call.1} parent=5 // pred_fallthru
        _
      %p178 = scmp.le.s32.totalorder 2, %s10
      // Predicated region
      $region33: #{tpu_custom_call.1} parent=5 // pred_check
        %p179 = pneg %p178
      $region34: #{tpu_custom_call.1} parent=5 // pred_check_branch
        %181 = sbr.rel (%p179) target = $region36
      $region35: #{tpu_custom_call.1} parent=5 // pred_region
        %s182 = ssub.s32 %s10, 2
        // Predicated region
        $region37: #{tpu_custom_call.1} parent=35 // pred_check
          %p183 = pneg %p65
        $region38: #{tpu_custom_call.1} parent=35 // pred_check_branch
          %185 = sbr.rel (%p183) target = $region40
        $region39: #{tpu_custom_call.1} parent=35 // pred_region
          %s186 = smul.u32 2, %s16
          %p187 = scmp.lt.s32.totalorder %s186, 7
          %s188 = scalar_select %p187, %s186, 7
          %s189 = smul.addr %s188, 2
          %s190 = smul.addr %s189, 8
          %s191 = scalar_lea.vmem %s1, %s190
        $region40: #{tpu_custom_call.1} parent=35 // pred_fallthru
          _
      $region36: #{tpu_custom_call.1} parent=5 // pred_fallthru
        _
    $region6: #{tpu_custom_call.1} parent=1 // loop_footer
      %s14 = sadd.s32 1, %s10
    $region7: #{tpu_custom_call.1} parent=1 // loop_footer_branch
      %9 = sbr.rel target = $region3
    $region8: #{tpu_custom_call.1} parent=1 // loop_exit
      _
    %192 = vsyncpa [#allocation3], 1
    %s193 = scalar_lea.sflag [#allocation3], 1
    %194 = vsyncpa %s193, 1

</llo_original>
